<compile_context>
chip_gen: v7x
topology: tpu7x:2x2x1
jax: 0.10.0
libtpu: 0.0.40
codegen_flags: <defaults>
</compile_context>

<pallas_src>
import functools

import jax
import jax.numpy as jnp
from jax.experimental import pallas as pl
from jax.experimental.pallas import tpu as pltpu

BN_EPS = 1e-5
LANE = 128
SUBLANE = 8


def _round_up(a, b):
    return (a + b - 1) // b * b


def _cdiv(a, b):
    return (a + b - 1) // b


def _vmem_budget_bytes():
    """Generation-aware VMEM budget (v5e/v6e: 128 MiB physical, v7x: 64 MiB)."""
    cap = 0
    try:
        info_fn = getattr(pltpu, "get_tpu_info", None)
        if info_fn is not None:
            cap = int(getattr(info_fn(), "vmem_capacity_bytes", 0) or 0)
    except Exception:
        cap = 0
    if cap <= 0:
        cap = 64 * 1024 * 1024  # conservative default = v7x physical VMEM
    return min(cap * 3 // 4, 100 * 1024 * 1024)


def _pick_tiles(n, row_tile):
    """Tile the batch with minimal padding; prefer >=2 tiles for v7x megacore."""
    tiles = _cdiv(n, row_tile)
    if n >= 2 * SUBLANE:
        tiles = max(tiles, 2)
    tn = _round_up(_cdiv(n, tiles), SUBLANE)
    num_tiles = _cdiv(n, tn)
    return tn, num_tiles, num_tiles * tn


# ---------------------------------------------------------------------------
# Fused single-call kernel: grid = (phase, tile), both sequential.
#   phase 0: h1 tile = x@W1+b1 -> bf16 VMEM scratch; accumulate masked batch
#            stats (ones-vector MXU matmuls) into a small VMEM scratch.
#   phase 1: (once) finalize BN scale/shift from the stats;
#            out tile = (h1*scale+shift) @ W23 + b23.
# ---------------------------------------------------------------------------
def _fused_kernel(x_ref, w1_ref, b1_ref, gamma_ref, beta_ref, w23_ref, b23_ref,
                  o_ref, h1_ref, stats_ref, bn_ref, *, n_valid):
    phase = pl.program_id(0)
    i = pl.program_id(1)
    tn = x_ref.shape[0]
    f32 = jnp.float32

    @pl.when(phase == 0)
    def _():
        @pl.when(i == 0)
        def _():
            stats_ref[...] = jnp.zeros_like(stats_ref)

        h1 = jnp.dot(x_ref[...].astype(jnp.bfloat16), w1_ref[...],
                     preferred_element_type=f32) + b1_ref[...]
        row0 = pl.multiple_of(i * tn, SUBLANE)
        h1_ref[pl.ds(row0, tn), :] = h1.astype(jnp.bfloat16)

        # Masked ones-vector: (1, TN) @ (TN, H) on the MXU. Masks padded rows
        # and keeps the cross-sublane reduction off the XLU.
        rows = jax.lax.broadcasted_iota(jnp.int32, (1, tn), 1) + i * tn
        maskv = (rows < n_valid).astype(f32)
        psum = jnp.dot(maskv, h1, preferred_element_type=f32)
        psumsq = jnp.dot(maskv, h1 * h1, preferred_element_type=f32)
        stats_ref[...] += jnp.concatenate([psum, psumsq], axis=0)

    @pl.when(phase == 1)
    def _():
        @pl.when(i == 0)
        def _():
            inv_n = 1.0 / n_valid
            mean = stats_ref[0:1, :] * inv_n
            var = jnp.maximum(stats_ref[1:2, :] * inv_n - mean * mean, 0.0)
            rstd = jax.lax.rsqrt(var + BN_EPS)
            scale = gamma_ref[...] * rstd
            shift = beta_ref[...] - mean * scale
            bn_ref[...] = jnp.concatenate([scale, shift], axis=0)

        row0 = pl.multiple_of(i * tn, SUBLANE)
        h1 = h1_ref[pl.ds(row0, tn), :].astype(f32)
        hn = h1 * bn_ref[0:1, :] + bn_ref[1:2, :]
        o_ref[...] = jnp.dot(hn.astype(jnp.bfloat16), w23_ref[...],
                             preferred_element_type=f32) + b23_ref[...]


# ---------------------------------------------------------------------------
# Two-pass fallback (h1 doesn't fit VMEM): bf16 h1 + BN folded into W23/b23.
# ---------------------------------------------------------------------------
def _pass1_kernel(x_ref, w1_ref, b1_ref, h1_ref, stats_ref, *, n_valid):
    i = pl.program_id(0)
    tn = x_ref.shape[0]
    f32 = jnp.float32

    h1 = jnp.dot(x_ref[...].astype(jnp.bfloat16), w1_ref[...],
                 preferred_element_type=f32) + b1_ref[...]
    h1_ref[...] = h1.astype(jnp.bfloat16)          # bf16 halves the HBM stream

    rows = jax.lax.broadcasted_iota(jnp.int32, (1, tn), 1) + i * tn
    maskv = (rows < n_valid).astype(f32)
    psum = jnp.dot(maskv, h1, preferred_element_type=f32)       # stats from f32
    psumsq = jnp.dot(maskv, h1 * h1, preferred_element_type=f32)
    stats_ref[...] = jnp.concatenate([psum, psumsq], axis=0)[None]


def _pass2_kernel(h1_ref, w23bn_ref, b23bn_ref, o_ref):
    # BN affine already folded into W23/b23 -> pure MXU matmul.
    o_ref[...] = jnp.dot(h1_ref[...], w23bn_ref[...],
                         preferred_element_type=jnp.float32) + b23bn_ref[...]


# ---------------------------------------------------------------------------
# Parameter packing (done once, outside the per-forward hot path).
# ---------------------------------------------------------------------------
def _pack_params(params):
    f32, bf16 = jnp.float32, jnp.bfloat16
    e, h = params["w1"].shape
    p = params["w3"].shape[1]
    e_pad, h_pad, p_pad = (_round_up(d, LANE) for d in (e, h, p))

    # Exact fusion of the two trailing Linears (no nonlinearity between them).
    w23 = params["w2"].astype(f32) @ params["w3"].astype(f32)              # (H, P)
    b23 = params["b2"].astype(f32) @ params["w3"].astype(f32) + params["b3"].astype(f32)

    def pad2(a, r, c, dt):
        return jnp.zeros((r, c), dt).at[:a.shape[0], :a.shape[1]].set(a.astype(dt))

    arrays = dict(
        w1=pad2(params["w1"], e_pad, h_pad, bf16),
        b1=pad2(params["b1"], 1, h_pad, f32),
        gamma=pad2(params["gamma"], 1, h_pad, f32),
        beta=pad2(params["beta"], 1, h_pad, f32),
        w23_f32=pad2(w23, h_pad, p_pad, f32),
        w23_bf16=pad2(w23, h_pad, p_pad, bf16),
        b23=pad2(b23, 1, p_pad, f32),
    )
    dims = (e, h, p, e_pad, h_pad, p_pad)
    return arrays, dims


def _forward_impl(x, arrs, *, dims, row_tile, force_two_pass):
    n = x.shape[0]
    e, h, p, e_pad, h_pad, p_pad = dims
    assert x.shape[1] == e
    f32, bf16 = jnp.float32, jnp.bfloat16

    tn, num_tiles, n_pad = _pick_tiles(n, row_tile)

    # Feed x directly (in-kernel bf16 cast) when no padding is needed.
    if n_pad == n and e_pad == e:
        x_in = x
    else:
        x_in = jnp.zeros((n_pad, e_pad), bf16).at[:n, :e].set(x.astype(bf16))
    x_bytes = jnp.dtype(x_in.dtype).itemsize

    vmem_budget = _vmem_budget_bytes()
    fused_need = (n_pad * h_pad * 2 + 4 * h_pad * 4                 # h1 + stats/bn scratch
                  + 2 * (e_pad * h_pad * 2 + h_pad * p_pad * 2      # resident weights (x2 buf)
                         + (3 * h_pad + p_pad) * 4
                         + tn * e_pad * x_bytes + tn * p_pad * 4)   # streamed tiles (x2 buf)
                  + (1 << 20))                                      # slack
    use_fused = (not force_two_pass) and (fused_need <= vmem_budget)

    cparams_seq = pltpu.CompilerParams(
        dimension_semantics=("arbitrary", "arbitrary"),
        vmem_limit_bytes=vmem_budget)
    cparams_par = pltpu.CompilerParams(
        dimension_semantics=("parallel",),
        vmem_limit_bytes=vmem_budget)

    if use_fused:
        outp = pl.pallas_call(
            functools.partial(_fused_kernel, n_valid=n),
            grid=(2, num_tiles),
            in_specs=[
                pl.BlockSpec((tn, e_pad), lambda ph, i: ((1 - ph) * i, 0)),  # x tile (pinned in phase 1)
                pl.BlockSpec((e_pad, h_pad), lambda ph, i: (0, 0)),          # W1 (resident)
                pl.BlockSpec((1, h_pad), lambda ph, i: (0, 0)),              # b1
                pl.BlockSpec((1, h_pad), lambda ph, i: (0, 0)),              # gamma
                pl.BlockSpec((1, h_pad), lambda ph, i: (0, 0)),              # beta
                pl.BlockSpec((h_pad, p_pad), lambda ph, i: (0, 0)),          # W23 (resident)
                pl.BlockSpec((1, p_pad), lambda ph, i: (0, 0)),              # b23
            ],
            out_specs=pl.BlockSpec((tn, p_pad), lambda ph, i: (ph * i, 0)),  # only written in phase 1
            out_shape=jax.ShapeDtypeStruct((n_pad, p_pad), f32),
            scratch_shapes=[
                pltpu.VMEM((n_pad, h_pad), bf16),   # resident h1 (no HBM round trip)
                pltpu.VMEM((2, h_pad), f32),        # [sum; sumsq]
                pltpu.VMEM((2, h_pad), f32),        # [scale; shift]
            ],
            compiler_params=cparams_seq,
        )(x_in, arrs["w1"], arrs["b1"], arrs["gamma"], arrs["beta"],
          arrs["w23_bf16"], arrs["b23"])
        return outp[:n, :p]

    # ---- pass 1: Linear1 (bf16 h1) + merged batch-stat partials --------------
    h1, stats = pl.pallas_call(
        functools.partial(_pass1_kernel, n_valid=n),
        grid=(num_tiles,),
        in_specs=[
            pl.BlockSpec((tn, e_pad), lambda i: (i, 0)),       # x tile
            pl.BlockSpec((e_pad, h_pad), lambda i: (0, 0)),    # W1 (resident)
            pl.BlockSpec((1, h_pad), lambda i: (0, 0)),        # b1 (resident)
        ],
        out_specs=[
            pl.BlockSpec((tn, h_pad), lambda i: (i, 0)),       # h1 tile (bf16)
            pl.BlockSpec((1, 2, h_pad), lambda i: (i, 0, 0)),  # [psum; psumsq]
        ],
        out_shape=[
            jax.ShapeDtypeStruct((n_pad, h_pad), bf16),
            jax.ShapeDtypeStruct((num_tiles, 2, h_pad), f32),
        ],
        compiler_params=cparams_par,
    )(x_in, arrs["w1"], arrs["b1"])

    # ---- tiny XLA glue: BN finalize + fold affine into W23/b23 ---------------
    total = jnp.sum(stats[:, 0, :], axis=0, keepdims=True)
    totalsq = jnp.sum(stats[:, 1, :], axis=0, keepdims=True)
    mean = total / n
    var = jnp.maximum(totalsq / n - mean * mean, 0.0)            # biased variance
    rstd = jax.lax.rsqrt(var + BN_EPS)
    scale = arrs["gamma"] * rstd                                  # (1, h_pad)
    shift = arrs["beta"] - mean * scale
    w23bn = (arrs["w23_f32"] * scale[0][:, None]).astype(bf16)    # (h_pad, p_pad)
    b23bn = arrs["b23"] + shift @ arrs["w23_f32"]                 # (1, p_pad)

    # ---- pass 2: pure MXU matmul --------------------------------------------
    outp = pl.pallas_call(
        _pass2_kernel,
        grid=(num_tiles,),
        in_specs=[
            pl.BlockSpec((tn, h_pad), lambda i: (i, 0)),       # h1 tile (bf16)
            pl.BlockSpec((h_pad, p_pad), lambda i: (0, 0)),    # W23*scale (resident)
            pl.BlockSpec((1, p_pad), lambda i: (0, 0)),        # folded bias (resident)
        ],
        out_specs=pl.BlockSpec((tn, p_pad), lambda i: (i, 0)),
        out_shape=jax.ShapeDtypeStruct((n_pad, p_pad), f32),
        compiler_params=cparams_par,
    )(h1, w23bn, b23bn)

    return outp[:n, :p]


def make_protonet_text_forward(params, *, row_tile=512, force_two_pass=False):
    """Packs parameters once and returns a jitted forward(x) callable."""
    arrays, dims = _pack_params(params)

    @jax.jit
    def jitted(x, arrs):
        return _forward_impl(x, arrs, dims=dims, row_tile=row_tile,
                             force_two_pass=force_two_pass)

    return lambda x: jitted(x, arrays)


# ---------------------------------------------------------------------------
# Init + pure-JAX reference (original, un-fused module semantics).
# ---------------------------------------------------------------------------
def init_params(key, embed_size, hidden_size, proto_dim):
    """Deterministic init mirroring PyTorch Linear default U[-1/sqrt(fan_in), +...]."""
    keys = jax.random.split(key, 6)

    def linear(kw, kb, fan_in, fan_out):
        bound = 1.0 / jnp.sqrt(fan_in)
        w = jax.random.uniform(kw, (fan_in, fan_out), jnp.float32, -bound, bound)
        b = jax.random.uniform(kb, (1, fan_out), jnp.float32, -bound, bound)
        return w, b

    w1, b1 = linear(keys[0], keys[1], embed_size, hidden_size)
    w2, b2 = linear(keys[2], keys[3], hidden_size, hidden_size)
    w3, b3 = linear(keys[4], keys[5], hidden_size, proto_dim)
    gamma = jnp.ones((1, hidden_size), jnp.float32)   # BatchNorm1d weight init
    beta = jnp.zeros((1, hidden_size), jnp.float32)   # BatchNorm1d bias init
    return dict(w1=w1, b1=b1, w2=w2, b2=b2, w3=w3, b3=b3, gamma=gamma, beta=beta)


def reference_forward(x, params):
    h1 = x @ params["w1"] + params["b1"]
    mean = jnp.mean(h1, axis=0, keepdims=True)
    var = jnp.mean((h1 - mean) ** 2, axis=0, keepdims=True)
    hn = (h1 - mean) / jnp.sqrt(var + BN_EPS) * params["gamma"] + params["beta"]
    h2 = hn @ params["w2"] + params["b2"]
    return h2 @ params["w3"] + params["b3"]


if __name__ == "__main__":
    embed_size, hidden_size, proto_dim = 32, 32, 16
    batch = 8

    key = jax.random.PRNGKey(0)
    kx, kp, kx2 = jax.random.split(key, 3)
    x = jax.random.normal(kx, (batch, embed_size), jnp.float32)
    params = init_params(kp, embed_size, hidden_size, proto_dim)
    ref = reference_forward(x, params)

    # Primary path: fused single-call kernel (h1 VMEM-resident).
    forward = make_protonet_text_forward(params)
    out = jax.block_until_ready(forward(x))
    assert out.shape == (batch, proto_dim)
    # Tolerance accounts for bf16 matmul operands (f32 accumulation) vs f32 ref.
    assert jnp.allclose(out, ref, atol=5e-2, rtol=5e-2), "fused path mismatch"

    # Two-pass fallback (bf16 h1 + BN folded into W23) on the same data.
    forward2 = make_protonet_text_forward(params, force_two_pass=True)
    out2 = jax.block_until_ready(forward2(x))
    assert jnp.allclose(out2, ref, atol=5e-2, rtol=5e-2), "two-pass path mismatch"

    # Lane/row-aligned shapes: exercises the unpadded-x path and >=2 grid tiles.
    e2, h2, p2, n2 = 128, 128, 64, 64
    params_a = init_params(jax.random.PRNGKey(1), e2, h2, p2)
    xa = jax.random.normal(kx2, (n2, e2), jnp.float32)
    ref_a = reference_forward(xa, params_a)
    for force in (False, True):
        fa = make_protonet_text_forward(params_a, force_two_pass=force)
        oa = jax.block_until_ready(fa(xa))
        assert oa.shape == (n2, p2)
        assert jnp.allclose(oa, ref_a, atol=5e-2, rtol=5e-2), "aligned path mismatch"

    print("KERNEL_OK")
</pallas_src>

<mosaic_0001>
module attributes {stable_mosaic.version = 11 : i64} {
  func.func @_fused_kernel(%arg0: i32, %arg1: i32, %arg2: memref<8x128xbf16, #tpu.memory_space<vmem>>, %arg3: memref<128x128xbf16, #tpu.memory_space<vmem>>, %arg4: memref<1x128xf32, #tpu.memory_space<vmem>>, %arg5: memref<1x128xf32, #tpu.memory_space<vmem>>, %arg6: memref<1x128xf32, #tpu.memory_space<vmem>>, %arg7: memref<128x128xbf16, #tpu.memory_space<vmem>>, %arg8: memref<1x128xf32, #tpu.memory_space<vmem>>, %arg9: memref<8x128xf32, #tpu.memory_space<vmem>>, %arg10: memref<8x128xbf16, #tpu.memory_space<vmem>>, %arg11: memref<2x128xf32, #tpu.memory_space<vmem>>, %arg12: memref<2x128xf32, #tpu.memory_space<vmem>>) attributes {dimension_semantics = [#tpu.dimension_semantics<arbitrary>, #tpu.dimension_semantics<arbitrary>], iteration_bounds = array<i64: 2, 1>, scalar_prefetch = 0 : i64, scratch_operands = 3 : i64, tpu.core_type = #tpu.core_type<tc>, window_params = [{transform_indices = @transform_0, window_bounds = array<i64: 8, 128>}, {pipeline_mode = #tpu.pipeline_mode<synchronous>, transform_indices = @transform_1, window_bounds = array<i64: 128, 128>}, {pipeline_mode = #tpu.pipeline_mode<synchronous>, transform_indices = @transform_2, window_bounds = array<i64: 1, 128>}, {pipeline_mode = #tpu.pipeline_mode<synchronous>, transform_indices = @transform_3, window_bounds = array<i64: 1, 128>}, {pipeline_mode = #tpu.pipeline_mode<synchronous>, transform_indices = @transform_4, window_bounds = array<i64: 1, 128>}, {pipeline_mode = #tpu.pipeline_mode<synchronous>, transform_indices = @transform_5, window_bounds = array<i64: 128, 128>}, {pipeline_mode = #tpu.pipeline_mode<synchronous>, transform_indices = @transform_6, window_bounds = array<i64: 1, 128>}, {transform_indices = @transform_7, window_bounds = array<i64: 8, 128>}]} {
    %c0_i32 = arith.constant 0 : i32
    %0 = arith.cmpi eq, %arg0, %c0_i32 : i32
    %1 = arith.extui %0 : i1 to i32
    %c0_i32_0 = arith.constant 0 : i32
    %2 = arith.cmpi ne, %1, %c0_i32_0 : i32
    scf.if %2 {
      %c0_i32_2 = arith.constant 0 : i32
      %6 = arith.cmpi eq, %arg1, %c0_i32_2 : i32
      %7 = arith.extui %6 : i1 to i32
      %c0_i32_3 = arith.constant 0 : i32
      %8 = arith.cmpi ne, %7, %c0_i32_3 : i32
      scf.if %8 {
        %cst_18 = arith.constant 0.000000e+00 : f32
        %35 = vector.broadcast %cst_18 : f32 to vector<2x128xf32>
        %c0_19 = arith.constant 0 : index
        %c0_20 = arith.constant 0 : index
        %36 = vector.load %arg11[%c0_19, %c0_20] : memref<2x128xf32, #tpu.memory_space<vmem>>, vector<2x128xf32>
        tpu.vector_store %arg11[%c0_19, %c0_20], %35 {strides = array<i32>} : memref<2x128xf32, #tpu.memory_space<vmem>>, vector<2x128xf32>,
      } else {
      }
      %c0 = arith.constant 0 : index
      %c0_4 = arith.constant 0 : index
      %9 = vector.load %arg2[%c0, %c0_4] : memref<8x128xbf16, #tpu.memory_space<vmem>>, vector<8x128xbf16>
      %c0_5 = arith.constant 0 : index
      %c0_6 = arith.constant 0 : index
      %10 = vector.load %arg3[%c0_5, %c0_6] : memref<128x128xbf16, #tpu.memory_space<vmem>>, vector<128x128xbf16>
      %cst = arith.constant dense<0.000000e+00> : vector<8x128xf32>
      %11 = tpu.matmul %9, %10, %cst {dimension_numbers = #tpu.dot_dimension_numbers<[1], [0], [0], [1], [0, 0, 1, 1], [], []>} : vector<8x128xbf16>, vector<128x128xbf16>, vector<8x128xf32> -> vector<8x128xf32>
      %c0_7 = arith.constant 0 : index
      %c0_8 = arith.constant 0 : index
      %12 = vector.load %arg4[%c0_7, %c0_8] : memref<1x128xf32, #tpu.memory_space<vmem>>, vector<1x128xf32>
      %13 = vector.broadcast %12 : vector<1x128xf32> to vector<8x128xf32>
      %14 = arith.addf %11, %13 : vector<8x128xf32>
      %c8_i32 = arith.constant 8 : i32
      %15 = arith.muli %arg1, %c8_i32 : i32
      %16 = tpu.assume_multiple %15, 8 : i32
      %17 = arith.truncf %14 : vector<8x128xf32> to vector<8x128xbf16>
      %18 = arith.index_cast %16 : i32 to index
      %c0_9 = arith.constant 0 : index
      %19 = vector.load %arg10[%18, %c0_9] : memref<8x128xbf16, #tpu.memory_space<vmem>>, vector<8x128xbf16>
      tpu.vector_store %arg10[%18, %c0_9], %17 {strides = array<i32>} : memref<8x128xbf16, #tpu.memory_space<vmem>>, vector<8x128xbf16>,
      %20 = tpu.iota {dimensions = array<i32: 1>} : vector<1x8xi32>
      %c8_i32_10 = arith.constant 8 : i32
      %21 = arith.muli %arg1, %c8_i32_10 : i32
      %22 = vector.broadcast %21 : i32 to vector<1x8xi32>
      %23 = arith.addi %20, %22 : vector<1x8xi32>
      %c8_i32_11 = arith.constant 8 : i32
      %24 = vector.broadcast %c8_i32_11 : i32 to vector<1x8xi32>
      %25 = arith.cmpi slt, %23, %24 : vector<1x8xi32>
      %26 = arith.extui %25 : vector<1x8xi1> to vector<1x8xi32>
      %27 = arith.sitofp %26 : vector<1x8xi32> to vector<1x8xf32>
      %cst_12 = arith.constant dense<0.000000e+00> : vector<1x128xf32>
      %28 = tpu.matmul %27, %14, %cst_12 {dimension_numbers = #tpu.dot_dimension_numbers<[1], [0], [0], [1], [0, 0, 1, 1], [], []>} : vector<1x8xf32>, vector<8x128xf32>, vector<1x128xf32> -> vector<1x128xf32>
      %29 = arith.mulf %14, %14 : vector<8x128xf32>
      %cst_13 = arith.constant dense<0.000000e+00> : vector<1x128xf32>
      %30 = tpu.matmul %27, %29, %cst_13 {dimension_numbers = #tpu.dot_dimension_numbers<[1], [0], [0], [1], [0, 0, 1, 1], [], []>} : vector<1x8xf32>, vector<8x128xf32>, vector<1x128xf32> -> vector<1x128xf32>
      %c0_14 = arith.constant 0 : index
      %c0_15 = arith.constant 0 : index
      %31 = vector.load %arg11[%c0_14, %c0_15] : memref<2x128xf32, #tpu.memory_space<vmem>>, vector<2x128xf32>
      %32 = tpu.concatenate %28, %30 in 0 : vector<1x128xf32>, vector<1x128xf32> -> vector<2x128xf32>
      %33 = arith.addf %31, %32 : vector<2x128xf32>
      %c0_16 = arith.constant 0 : index
      %c0_17 = arith.constant 0 : index
      %34 = vector.load %arg11[%c0_16, %c0_17] : memref<2x128xf32, #tpu.memory_space<vmem>>, vector<2x128xf32>
      tpu.vector_store %arg11[%c0_16, %c0_17], %33 {strides = array<i32>} : memref<2x128xf32, #tpu.memory_space<vmem>>, vector<2x128xf32>,
    } else {
    }
    %c1_i32 = arith.constant 1 : i32
    %3 = arith.cmpi eq, %arg0, %c1_i32 : i32
    %4 = arith.extui %3 : i1 to i32
    %c0_i32_1 = arith.constant 0 : i32
    %5 = arith.cmpi ne, %4, %c0_i32_1 : i32
    scf.if %5 {
      %c0_i32_2 = arith.constant 0 : i32
      %6 = arith.cmpi eq, %arg1, %c0_i32_2 : i32
      %7 = arith.extui %6 : i1 to i32
      %c0_i32_3 = arith.constant 0 : i32
      %8 = arith.cmpi ne, %7, %c0_i32_3 : i32
      scf.if %8 {
        %c0_13 = arith.constant 0 : index
        %c0_14 = arith.constant 0 : index
        %27 = vector.load %arg11[%c0_13, %c0_14] : memref<2x128xf32, #tpu.memory_space<vmem>>, vector<1x128xf32>
        %cst_15 = arith.constant 1.250000e-01 : f32
        %28 = vector.broadcast %cst_15 : f32 to vector<1x128xf32>
        %29 = arith.mulf %27, %28 : vector<1x128xf32>
        %c1_16 = arith.constant 1 : index
        %c0_17 = arith.constant 0 : index
        %30 = vector.load %arg11[%c1_16, %c0_17] : memref<2x128xf32, #tpu.memory_space<vmem>>, vector<1x128xf32>
        %cst_18 = arith.constant 1.250000e-01 : f32
        %31 = vector.broadcast %cst_18 : f32 to vector<1x128xf32>
        %32 = arith.mulf %30, %31 : vector<1x128xf32>
        %33 = arith.mulf %29, %29 : vector<1x128xf32>
        %34 = arith.subf %32, %33 : vector<1x128xf32>
        %cst_19 = arith.constant 0.000000e+00 : f32
        %35 = vector.broadcast %cst_19 : f32 to vector<1x128xf32>
        %36 = arith.maximumf %34, %35 : vector<1x128xf32>
        %cst_20 = arith.constant 9.99999974E-6 : f32
        %37 = vector.broadcast %cst_20 : f32 to vector<1x128xf32>
        %38 = arith.addf %36, %37 : vector<1x128xf32>
        %39 = math.rsqrt %38 : vector<1x128xf32>
        %c0_21 = arith.constant 0 : index
        %c0_22 = arith.constant 0 : index
        %40 = vector.load %arg5[%c0_21, %c0_22] : memref<1x128xf32, #tpu.memory_space<vmem>>, vector<1x128xf32>
        %41 = arith.mulf %40, %39 : vector<1x128xf32>
        %c0_23 = arith.constant 0 : index
        %c0_24 = arith.constant 0 : index
        %42 = vector.load %arg6[%c0_23, %c0_24] : memref<1x128xf32, #tpu.memory_space<vmem>>, vector<1x128xf32>
        %43 = arith.mulf %29, %41 : vector<1x128xf32>
        %44 = arith.subf %42, %43 : vector<1x128xf32>
        %45 = tpu.concatenate %41, %44 in 0 : vector<1x128xf32>, vector<1x128xf32> -> vector<2x128xf32>
        %c0_25 = arith.constant 0 : index
        %c0_26 = arith.constant 0 : index
        %46 = vector.load %arg12[%c0_25, %c0_26] : memref<2x128xf32, #tpu.memory_space<vmem>>, vector<2x128xf32>
        tpu.vector_store %arg12[%c0_25, %c0_26], %45 {strides = array<i32>} : memref<2x128xf32, #tpu.memory_space<vmem>>, vector<2x128xf32>,
      } else {
      }
      %c8_i32 = arith.constant 8 : i32
      %9 = arith.muli %arg1, %c8_i32 : i32
      %10 = tpu.assume_multiple %9, 8 : i32
      %11 = arith.index_cast %10 : i32 to index
      %c0 = arith.constant 0 : index
      %12 = vector.load %arg10[%11, %c0] : memref<8x128xbf16, #tpu.memory_space<vmem>>, vector<8x128xbf16>
      %13 = arith.extf %12 : vector<8x128xbf16> to vector<8x128xf32>
      %c0_4 = arith.constant 0 : index
      %c0_5 = arith.constant 0 : index
      %14 = vector.load %arg12[%c0_4, %c0_5] : memref<2x128xf32, #tpu.memory_space<vmem>>, vector<1x128xf32>
      %15 = vector.broadcast %14 : vector<1x128xf32> to vector<8x128xf32>
      %16 = arith.mulf %13, %15 : vector<8x128xf32>
      %c1 = arith.constant 1 : index
      %c0_6 = arith.constant 0 : index
      %17 = vector.load %arg12[%c1, %c0_6] : memref<2x128xf32, #tpu.memory_space<vmem>>, vector<1x128xf32>
      %18 = vector.broadcast %17 : vector<1x128xf32> to vector<8x128xf32>
      %19 = arith.addf %16, %18 : vector<8x128xf32>
      %20 = arith.truncf %19 : vector<8x128xf32> to vector<8x128xbf16>
      %c0_7 = arith.constant 0 : index
      %c0_8 = arith.constant 0 : index
      %21 = vector.load %arg7[%c0_7, %c0_8] : memref<128x128xbf16, #tpu.memory_space<vmem>>, vector<128x128xbf16>
      %cst = arith.constant dense<0.000000e+00> : vector<8x128xf32>
      %22 = tpu.matmul %20, %21, %cst {dimension_numbers = #tpu.dot_dimension_numbers<[1], [0], [0], [1], [0, 0, 1, 1], [], []>} : vector<8x128xbf16>, vector<128x128xbf16>, vector<8x128xf32> -> vector<8x128xf32>
      %c0_9 = arith.constant 0 : index
      %c0_10 = arith.constant 0 : index
      %23 = vector.load %arg8[%c0_9, %c0_10] : memref<1x128xf32, #tpu.memory_space<vmem>>, vector<1x128xf32>
      %24 = vector.broadcast %23 : vector<1x128xf32> to vector<8x128xf32>
      %25 = arith.addf %22, %24 : vector<8x128xf32>
      %c0_11 = arith.constant 0 : index
      %c0_12 = arith.constant 0 : index
      %26 = vector.load %arg9[%c0_11, %c0_12] : memref<8x128xf32, #tpu.memory_space<vmem>>, vector<8x128xf32>
      tpu.vector_store %arg9[%c0_11, %c0_12], %25 {strides = array<i32>} : memref<8x128xf32, #tpu.memory_space<vmem>>, vector<8x128xf32>,
    } else {
    }
    return
  }
  func.func @transform_0(%arg0: i32, %arg1: i32) -> (i32, i32) {
    %c1_i32 = arith.constant 1 : i32
    %0 = arith.subi %c1_i32, %arg0 : i32
    %1 = arith.muli %0, %arg1 : i32
    %c0_i32 = arith.constant 0 : i32
    %c0_i32_0 = arith.constant 0 : i32
    return %1, %c0_i32 : i32, i32
  }
  func.func @transform_1(%arg0: i32, %arg1: i32) -> (i32, i32) {
    %c0_i32 = arith.constant 0 : i32
    %c0_i32_0 = arith.constant 0 : i32
    %c0_i32_1 = arith.constant 0 : i32
    return %c0_i32, %c0_i32_0 : i32, i32
  }
  func.func @transform_2(%arg0: i32, %arg1: i32) -> (i32, i32) {
    %c0_i32 = arith.constant 0 : i32
    %c0_i32_0 = arith.constant 0 : i32
    %c0_i32_1 = arith.constant 0 : i32
    return %c0_i32, %c0_i32_0 : i32, i32
  }
  func.func @transform_3(%arg0: i32, %arg1: i32) -> (i32, i32) {
    %c0_i32 = arith.constant 0 : i32
    %c0_i32_0 = arith.constant 0 : i32
    %c0_i32_1 = arith.constant 0 : i32
    return %c0_i32, %c0_i32_0 : i32, i32
  }
  func.func @transform_4(%arg0: i32, %arg1: i32) -> (i32, i32) {
    %c0_i32 = arith.constant 0 : i32
    %c0_i32_0 = arith.constant 0 : i32
    %c0_i32_1 = arith.constant 0 : i32
    return %c0_i32, %c0_i32_0 : i32, i32
  }
  func.func @transform_5(%arg0: i32, %arg1: i32) -> (i32, i32) {
    %c0_i32 = arith.constant 0 : i32
    %c0_i32_0 = arith.constant 0 : i32
    %c0_i32_1 = arith.constant 0 : i32
    return %c0_i32, %c0_i32_0 : i32, i32
  }
  func.func @transform_6(%arg0: i32, %arg1: i32) -> (i32, i32) {
    %c0_i32 = arith.constant 0 : i32
    %c0_i32_0 = arith.constant 0 : i32
    %c0_i32_1 = arith.constant 0 : i32
    return %c0_i32, %c0_i32_0 : i32, i32
  }
  func.func @transform_7(%arg0: i32, %arg1: i32) -> (i32, i32) {
    %0 = arith.muli %arg0, %arg1 : i32
    %c0_i32 = arith.constant 0 : i32
    %c0_i32_0 = arith.constant 0 : i32
    return %0, %c0_i32 : i32, i32
  }
}

</mosaic_0001>

<llo_original>
// kernel: jitted.1
$region0: #{jitted.1}
  #allocation0 [shape = 'u32[]', space=smem, size = 0x4, offset = 0x4, fixed_abs, tag = 'smem constant byte address 0x4 - core index']
  #allocation1 [shape = 'u32[144,128]{1,0:T(1,128)}', space=vmem, size = 0x12000, scoped, tag = 'internal scratch']
  #allocation2 [shape = 'bf16[8,128]{1,0:T(8,128)(2,1)}', space=vmem, size = 0x800, scoped, tag = 'scratch operand']
  #allocation3 [shape = 'f32[2,128]{1,0:T(2,128)}', space=vmem, size = 0x400, scoped, tag = 'scratch operand']
  #allocation4 [shape = 'f32[2,128]{1,0:T(2,128)}', space=vmem, size = 0x400, scoped, tag = 'scratch operand']
  %s0 = inlined_call_operand.vmem [shape: bf16[8,128], index: 0, kind: input, shape index: {}]
  %s1 = inlined_call_operand.hbm [shape: bf16[128,128], index: 1, kind: input, shape index: {}]
  %s2 = inlined_call_operand.vmem [shape: f32[1,128], index: 2, kind: input, shape index: {}]
  %s3 = inlined_call_operand.vmem [shape: f32[1,128], index: 3, kind: input, shape index: {}]
  %s4 = inlined_call_operand.vmem [shape: f32[1,128], index: 4, kind: input, shape index: {}]
  %s5 = inlined_call_operand.hbm [shape: bf16[128,128], index: 5, kind: input, shape index: {}]
  %s6 = inlined_call_operand.vmem [shape: f32[1,128], index: 6, kind: input, shape index: {}]
  %s7 = inlined_call_operand.hbm [shape: f32[8,128], index: 7, kind: output, shape index: {}]
  %s8 = sld [smem:[#allocation0]]
  $region85: #{jitted.1} parent=0
    _
  %s10 = ssub.s32 1, %s8
  %s11 = scalar_select 0, %s10, %s8
  $region1: #{jitted.1} parent=0
    #allocation5 [shape = 'u8[32768]{0}', space=vmem, size = 0x8000, scoped, tag = 'input window, operand 1, single buffered']
    #allocation6 [shape = 's32[2]{0}', space=sflag, size = 0x8, scoped, tag = 'scoped memory for jitted.1']
    #allocation7 [shape = 's32[2]{0}', space=sflag, size = 0x8, scoped, tag = 'scoped memory for jitted.1']
    #allocation8 [shape = 'u8[32768]{0}', space=vmem, size = 0x8000, scoped, tag = 'input window, operand 5, single buffered']
    #allocation9 [shape = 's32[1]{0}', space=sflag, size = 0x4, scoped, tag = 'scoped memory for jitted.1']
    #allocation10 [shape = 'u8[8192]{0}', space=vmem, size = 0x2000, scoped, tag = 'output window, operand 0']
    %12 = vsyncpa [#allocation6], 0
    %13 = vsyncpa [#allocation9], 0
    %14 = vsyncpa [#allocation7], 0
    %s15 = scalar_lea.sflag [#allocation7], 1
    %16 = vsyncpa %s15, 0
    loop: start=0, step=1, limit=4
    $region2: #{jitted.1} parent=1 // loop_pre_header
      _
    $region3: #{jitted.1} parent=1 // loop_header
      %s18 = sphi 0, %s22
      %p19 = scmp.ge.s32.totalorder %s18, 4
      %s25 = sphi 0, %s37
      %s26 = sphi 0, %s33
      %s27 = sphi 0, %s25
      %s28 = sphi 0, %s26
      %s29 = sphi 0, %s27
      %s30 = sphi 0, %s28
      %s44 = sphi 0, %s46
      %s47 = sphi 0, %s44
      %s48 = sphi 0, %s47
      %s64 = sphi 0, %s48
      %s68 = sphi 0, %s68
      %s70 = sphi 0, %s68
      %s71 = sphi 0, %s70
      %s85 = sphi 0, %s71
      %s89 = sphi 0, %s89
      %s91 = sphi 0, %s89
      %s92 = sphi 0, %s91
      %s106 = sphi 0, %s92
      %s110 = sphi 0, %s110
      %s112 = sphi 0, %s110
      %s113 = sphi 0, %s112
      %s127 = sphi 0, %s113
      %s131 = sphi 0, %s131
      %s133 = sphi 0, %s131
      %s134 = sphi 0, %s133
      %s148 = sphi 0, %s134
      %s152 = sphi 0, %s152
      %s154 = sphi 0, %s152
      %s155 = sphi 0, %s154
      %s169 = sphi 0, %s155
      %s173 = sphi 0, %s173
      %s175 = sphi 0, %s173
      %s176 = sphi 0, %s175
      %s190 = sphi 0, %s176
      %s198 = sphi 0, %s200
      %s201 = sphi 0, %s198
      %s202 = sphi 0, %s201
      %s218 = sphi 0, %s202
    $region4: #{jitted.1} parent=1 // loop_header_branch
      %21 = sbr.rel (%p19) target = $region8
    $region5: #{jitted.1} parent=1 // loop_body
      %s23 = ssub.s32 %s18, 1
      %s24 = ssub.s32 %s18, 2
      %s31 = sadd.s32 1, %s26
      %p32 = scmp.ge.s32.totalorder %s31, 1
      %s33 = scalar_select %p32, 0, %s31
      %s34 = sadd.s32 1, %s25
      %s35 = scalar_select %p32, %s34, %s25
      %p36 = scmp.ge.s32.totalorder %s35, 2
      %s37 = scalar_select %p36, 0, %s35
      %s38 = ssub.s32 1, %s25
      %s39 = smul.u32 %s38, %s26
      %s40 = ssub.s32 1, %s37
      %s41 = smul.u32 %s40, %s33
      %s42 = ssub.s32 %s39, %s41
      %p43 = scmp.eq.s32.totalorder %s42, 0
      %s45 = sadd.s32 %s44, 1
      %s46 = scalar_select %p43, %s44, %s45
      %p49 = pneg %p43
      %p50 = scmp.eq.s32.totalorder %s18, 1
      %p51 = por %p49, %p50
      %p52 = scmp.ne.s32.totalorder %s44, %s47
      %p53 = scmp.eq.s32.totalorder %s18, 0
      %p54 = por %p52, %p53
      %p55 = scmp.ne.s32.totalorder %s44, %s47
      %p56 = scmp.eq.s32.totalorder %s23, 1
      %p57 = por %p55, %p56
      %p58 = scmp.ne.s32.totalorder %s47, %s48
      %p59 = scmp.eq.s32.totalorder %s23, 0
      %p60 = por %p58, %p59
      %p61 = scmp.ne.s32.totalorder %s47, %s48
      %p62 = scmp.eq.s32.totalorder %s24, 1
      %p63 = por %p61, %p62
      %p65 = scmp.ne.s32.totalorder %s48, %s64
      %p66 = scmp.eq.s32.totalorder %s24, 0
      %p67 = por %p65, %p66
      %s69 = sadd.s32 %s68, 1
      %p72 = scmp.eq.s32.totalorder %s18, 1
      %p73 = scmp.ne.s32.totalorder %s68, %s70
      %p74 = scmp.eq.s32.totalorder %s18, 0
      %p75 = por %p73, %p74
      %p76 = scmp.ne.s32.totalorder %s68, %s70
      %p77 = scmp.eq.s32.totalorder %s23, 1
      %p78 = por %p76, %p77
      %p79 = scmp.ne.s32.totalorder %s70, %s71
      %p80 = scmp.eq.s32.totalorder %s23, 0
      %p81 = por %p79, %p80
      %p82 = scmp.ne.s32.totalorder %s70, %s71
      %p83 = scmp.eq.s32.totalorder %s24, 1
      %p84 = por %p82, %p83
      %p86 = scmp.ne.s32.totalorder %s71, %s85
      %p87 = scmp.eq.s32.totalorder %s24, 0
      %p88 = por %p86, %p87
      %s90 = sadd.s32 %s89, 1
      %p93 = scmp.eq.s32.totalorder %s18, 1
      %p94 = scmp.ne.s32.totalorder %s89, %s91
      %p95 = scmp.eq.s32.totalorder %s18, 0
      %p96 = por %p94, %p95
      %p97 = scmp.ne.s32.totalorder %s89, %s91
      %p98 = scmp.eq.s32.totalorder %s23, 1
      %p99 = por %p97, %p98
      %p100 = scmp.ne.s32.totalorder %s91, %s92
      %p101 = scmp.eq.s32.totalorder %s23, 0
      %p102 = por %p100, %p101
      %p103 = scmp.ne.s32.totalorder %s91, %s92
      %p104 = scmp.eq.s32.totalorder %s24, 1
      %p105 = por %p103, %p104
      %p107 = scmp.ne.s32.totalorder %s92, %s106
      %p108 = scmp.eq.s32.totalorder %s24, 0
      %p109 = por %p107, %p108
      %s111 = sadd.s32 %s110, 1
      %p114 = scmp.eq.s32.totalorder %s18, 1
      %p115 = scmp.ne.s32.totalorder %s110, %s112
      %p116 = scmp.eq.s32.totalorder %s18, 0
      %p117 = por %p115, %p116
      %p118 = scmp.ne.s32.totalorder %s110, %s112
      %p119 = scmp.eq.s32.totalorder %s23, 1
      %p120 = por %p118, %p119
      %p121 = scmp.ne.s32.totalorder %s112, %s113
      %p122 = scmp.eq.s32.totalorder %s23, 0
      %p123 = por %p121, %p122
      %p124 = scmp.ne.s32.totalorder %s112, %s113
      %p125 = scmp.eq.s32.totalorder %s24, 1
      %p126 = por %p124, %p125
      %p128 = scmp.ne.s32.totalorder %s113, %s127
      %p129 = scmp.eq.s32.totalorder %s24, 0
      %p130 = por %p128, %p129
      %s132 = sadd.s32 %s131, 1
      %p135 = scmp.eq.s32.totalorder %s18, 1
      %p136 = scmp.ne.s32.totalorder %s131, %s133
      %p137 = scmp.eq.s32.totalorder %s18, 0
      %p138 = por %p136, %p137
      %p139 = scmp.ne.s32.totalorder %s131, %s133
      %p140 = scmp.eq.s32.totalorder %s23, 1
      %p141 = por %p139, %p140
      %p142 = scmp.ne.s32.totalorder %s133, %s134
      %p143 = scmp.eq.s32.totalorder %s23, 0
      %p144 = por %p142, %p143
      %p145 = scmp.ne.s32.totalorder %s133, %s134
      %p146 = scmp.eq.s32.totalorder %s24, 1
      %p147 = por %p145, %p146
      %p149 = scmp.ne.s32.totalorder %s134, %s148
      %p150 = scmp.eq.s32.totalorder %s24, 0
      %p151 = por %p149, %p150
      %s153 = sadd.s32 %s152, 1
      %p156 = scmp.eq.s32.totalorder %s18, 1
      %p157 = scmp.ne.s32.totalorder %s152, %s154
      %p158 = scmp.eq.s32.totalorder %s18, 0
      %p159 = por %p157, %p158
      %p160 = scmp.ne.s32.totalorder %s152, %s154
      %p161 = scmp.eq.s32.totalorder %s23, 1
      %p162 = por %p160, %p161
      %p163 = scmp.ne.s32.totalorder %s154, %s155
      %p164 = scmp.eq.s32.totalorder %s23, 0
      %p165 = por %p163, %p164
      %p166 = scmp.ne.s32.totalorder %s154, %s155
      %p167 = scmp.eq.s32.totalorder %s24, 1
      %p168 = por %p166, %p167
      %p170 = scmp.ne.s32.totalorder %s155, %s169
      %p171 = scmp.eq.s32.totalorder %s24, 0
      %p172 = por %p170, %p171
      %s174 = sadd.s32 %s173, 1
      %p177 = scmp.eq.s32.totalorder %s18, 1
      %p178 = scmp.ne.s32.totalorder %s173, %s175
      %p179 = scmp.eq.s32.totalorder %s18, 0
      %p180 = por %p178, %p179
      %p181 = scmp.ne.s32.totalorder %s173, %s175
      %p182 = scmp.eq.s32.totalorder %s23, 1
      %p183 = por %p181, %p182
      %p184 = scmp.ne.s32.totalorder %s175, %s176
      %p185 = scmp.eq.s32.totalorder %s23, 0
      %p186 = por %p184, %p185
      %p187 = scmp.ne.s32.totalorder %s175, %s176
      %p188 = scmp.eq.s32.totalorder %s24, 1
      %p189 = por %p187, %p188
      %p191 = scmp.ne.s32.totalorder %s176, %s190
      %p192 = scmp.eq.s32.totalorder %s24, 0
      %p193 = por %p191, %p192
      %s194 = smul.u32 %s25, %s26
      %s195 = smul.u32 %s37, %s33
      %s196 = ssub.s32 %s194, %s195
      %p197 = scmp.eq.s32.totalorder %s196, 0
      %s199 = sadd.s32 %s198, 1
      %s200 = scalar_select %p197, %s198, %s199
      %p203 = pneg %p197
      %p204 = scmp.eq.s32.totalorder %s18, 1
      %p205 = por %p203, %p204
      %p206 = scmp.ne.s32.totalorder %s198, %s201
      %p207 = scmp.eq.s32.totalorder %s18, 0
      %p208 = por %p206, %p207
      %p209 = scmp.ne.s32.totalorder %s198, %s201
      %p210 = scmp.eq.s32.totalorder %s23, 1
      %p211 = por %p209, %p210
      %p212 = scmp.ne.s32.totalorder %s201, %s202
      %p213 = scmp.eq.s32.totalorder %s23, 0
      %p214 = por %p212, %p213
      %p215 = scmp.ne.s32.totalorder %s201, %s202
      %p216 = scmp.eq.s32.totalorder %s24, 1
      %p217 = por %p215, %p216
      %p219 = scmp.ne.s32.totalorder %s202, %s218
      %p220 = scmp.eq.s32.totalorder %s24, 0
      %p221 = por %p219, %p220
      %p222 = scmp.le.s32.totalorder 1, %s18
      %p223 = scmp.lt.s32.totalorder %s18, 3
      %p224 = pnand %p222, %p223
      %p225 = pneg %p224
      // Predicated region
      $region9: #{jitted.1} parent=5 // pred_check
        _
      $region10: #{jitted.1} parent=5 // pred_check_branch
        %227 = sbr.rel (%p224) target = $region12
      $region11: #{jitted.1} parent=5 // pred_region
        %s228 = ssub.s32 %s18, 1
        // Predicated region
        $region13: #{jitted.1} parent=11 // pred_check
          %p229 = pneg %p81
        $region14: #{jitted.1} parent=11 // pred_check_branch
          %231 = sbr.rel (%p229) target = $region16
        $region15: #{jitted.1} parent=11 // pred_region
          %s233 = ssub.s32 1024, 1024
          %234 = vsyncadd [#allocation6], %s233
          %s235 = sshll.u32 [#allocation5], 4
          %s236 = int_to_ptr.vmem [resolvable:$true] %s235
          %241 = dma.hbm_to_vmem [thread:$0]  %s1, 1024, %s236, [#allocation6], 64, 64, 4
        $region16: #{jitted.1} parent=11 // pred_fallthru
          _
        // Predicated region
        $region17: #{jitted.1} parent=11 // pred_check
          %p242 = pneg %p102
        $region18: #{jitted.1} parent=11 // pred_check_branch
          %244 = sbr.rel (%p242) target = $region20
        $region19: #{jitted.1} parent=11 // pred_region
          _
        $region20: #{jitted.1} parent=11 // pred_fallthru
          _
        // Predicated region
        $region21: #{jitted.1} parent=11 // pred_check
          %p245 = pneg %p123
        $region22: #{jitted.1} parent=11 // pred_check_branch
          %247 = sbr.rel (%p245) target = $region24
        $region23: #{jitted.1} parent=11 // pred_region
          _
        $region24: #{jitted.1} parent=11 // pred_fallthru
          _
        // Predicated region
        $region25: #{jitted.1} parent=11 // pred_check
          %p248 = pneg %p144
        $region26: #{jitted.1} parent=11 // pred_check_branch
          %250 = sbr.rel (%p248) target = $region28
        $region27: #{jitted.1} parent=11 // pred_region
          _
        $region28: #{jitted.1} parent=11 // pred_fallthru
          _
        // Predicated region
        $region29: #{jitted.1} parent=11 // pred_check
          %p251 = pneg %p165
        $region30: #{jitted.1} parent=11 // pred_check_branch
          %253 = sbr.rel (%p251) target = $region32
        $region31: #{jitted.1} parent=11 // pred_region
          %s255 = ssub.s32 1024, 1024
          %256 = vsyncadd [#allocation9], %s255
          %s257 = sshll.u32 [#allocation8], 4
          %s258 = int_to_ptr.vmem [resolvable:$true] %s257
          %263 = dma.hbm_to_vmem [thread:$0]  %s5, 1024, %s258, [#allocation9], 64, 64, 4
        $region32: #{jitted.1} parent=11 // pred_fallthru
          _
        // Predicated region
        $region33: #{jitted.1} parent=11 // pred_check
          %p264 = pneg %p186
        $region34: #{jitted.1} parent=11 // pred_check_branch
          %266 = sbr.rel (%p264) target = $region36
        $region35: #{jitted.1} parent=11 // pred_region
          _
        $region36: #{jitted.1} parent=11 // pred_fallthru
          _
      $region12: #{jitted.1} parent=5 // pred_fallthru
        _
      %p267 = scmp.lt.s32.totalorder %s18, 2
      // Predicated region
      $region37: #{jitted.1} parent=5 // pred_check
        %p268 = pneg %p267
      $region38: #{jitted.1} parent=5 // pred_check_branch
        %270 = sbr.rel (%p268) target = $region40
      $region39: #{jitted.1} parent=5 // pred_region
        // Predicated region
        $region41: #{jitted.1} parent=39 // pred_check
          %p271 = pneg %p54
        $region42: #{jitted.1} parent=39 // pred_check_branch
          %273 = sbr.rel (%p271) target = $region44
        $region43: #{jitted.1} parent=39 // pred_region
          %s274 = ssub.s32 1, %s25
          %s275 = smul.u32 %s274, %s26
          %p276 = scmp.lt.s32.totalorder %s275, 0
          %s277 = scalar_select %p276, %s275, 0
          %s278 = smul.addr %s277, 4
          %s279 = scalar_lea.vmem %s0, %s278
          %s280 = ssub.s32 1, %s25
          %s281 = smul.u32 %s280, %s26
        $region44: #{jitted.1} parent=39 // pred_fallthru
          _
      $region40: #{jitted.1} parent=5 // pred_fallthru
        _
      %p282 = scmp.le.s32.totalorder 1, %s18
      %p283 = scmp.lt.s32.totalorder %s18, 3
      %p284 = pnand %p282, %p283
      %p285 = pneg %p284
      // Predicated region
      $region45: #{jitted.1} parent=5 // pred_check
        _
      $region46: #{jitted.1} parent=5 // pred_check_branch
        %287 = sbr.rel (%p284) target = $region48
      $region47: #{jitted.1} parent=5 // pred_region
        %s288 = ssub.s32 %s18, 1
        // Predicated region
        $region49: #{jitted.1} parent=47 // pred_check
          %p289 = pneg %p81
        $region50: #{jitted.1} parent=47 // pred_check_branch
          %291 = sbr.rel (%p289) target = $region52
        $region51: #{jitted.1} parent=47 // pred_region
          %292 = dma.done [#allocation6], 1024
        $region52: #{jitted.1} parent=47 // pred_fallthru
          _
        // Predicated region
        $region53: #{jitted.1} parent=47 // pred_check
          %p293 = pneg %p165
        $region54: #{jitted.1} parent=47 // pred_check_branch
          %295 = sbr.rel (%p293) target = $region56
        $region55: #{jitted.1} parent=47 // pred_region
          %296 = dma.done [#allocation9], 1024
        $region56: #{jitted.1} parent=47 // pred_fallthru
          _
        %s297 = ssub.s32 1, %s27
        %s298 = smul.u32 %s297, %s28
        %p299 = scmp.lt.s32.totalorder %s298, 0
        %s300 = scalar_select %p299, %s298, 0
        %s301 = smul.addr %s300, 4
        %s302 = scalar_lea.vmem %s0, %s301
        %p303 = pneg %p60
        %p304 = pneg %p57
        %p305 = pneg %p81
        %p306 = pneg %p78
        %p307 = pneg %p102
        %p308 = pneg %p99
        %p309 = pneg %p123
        %p310 = pneg %p120
        %p311 = pneg %p144
        %p312 = pneg %p141
        %p313 = pneg %p165
        %p314 = pneg %p162
        %p315 = pneg %p186
        %p316 = pneg %p183
        %p317 = pneg %p214
        %p318 = pneg %p211
        %s319 = sand.u32 %s201, 1
        %s320 = scalar_lea.sflag [#allocation7], %s319
        %s321 = sand.u32 %s201, 1
        %s322 = smul.addr %s321, 8
        %s323 = scalar_lea.vmem [#allocation10], %s322
        %s324 = ssub.s32 1, %s27
        %s325 = smul.u32 %s324, %s28
        %p326 = scmp.lt.s32.totalorder %s325, 0
        %s327 = scalar_select %p326, %s325, 0
        %s328 = smul.addr %s327, 4
        %s329 = scalar_lea.vmem %s0, %s328
        %s330 = ssub.s32 1, %s27
        %s331 = smul.u32 %s330, %s28
        %s332 = smul.u32 %s27, %s28
        %p334 = scmp.eq.s32.totalorder %s27, 0
        // Predicated region
        $region57: #{jitted.1} parent=47 // pred_check
          %p335 = pneg %p334
        $region58: #{jitted.1} parent=47 // pred_check_branch
          %337 = sbr.rel (%p335) target = $region60
        $region59: #{jitted.1} parent=47 // pred_region
          %p338 = scmp.eq.s32.totalorder %s28, 0
          // Predicated region
          $region61: #{jitted.1} parent=59 // pred_check
            %p339 = pneg %p338
          $region62: #{jitted.1} parent=59 // pred_check_branch
            %341 = sbr.rel (%p339) target = $region64
          $region63: #{jitted.1} parent=59 // pred_region
            %342 = vst [vmem:[#allocation3] sm:$0x3] 0.0
          $region64: #{jitted.1} parent=59 // pred_fallthru
            _
          %v343 = vld [vmem:[%s329] sm:$0xf]
          %v344 = vld [vmem:[#allocation5] sm:$0xf]
          %v345 = vld [vmem:[#allocation5 + $0x4] sm:$0xf]
          %v346 = vld [vmem:[#allocation5 + $0x8] sm:$0xf]
          %v347 = vld [vmem:[#allocation5 + $0xc] sm:$0xf]
          %v348 = vld [vmem:[#allocation5 + $0x10] sm:$0xf]
          %v349 = vld [vmem:[#allocation5 + $0x14] sm:$0xf]
          %v350 = vld [vmem:[#allocation5 + $0x18] sm:$0xf]
          %v351 = vld [vmem:[#allocation5 + $0x1c] sm:$0xf]
          %v352 = vld [vmem:[#allocation5 + $0x20] sm:$0xf]
          %v353 = vld [vmem:[#allocation5 + $0x24] sm:$0xf]
          %v354 = vld [vmem:[#allocation5 + $0x28] sm:$0xf]
          %v355 = vld [vmem:[#allocation5 + $0x2c] sm:$0xf]
          %v356 = vld [vmem:[#allocation5 + $0x30] sm:$0xf]
          %v357 = vld [vmem:[#allocation5 + $0x34] sm:$0xf]
          %v358 = vld [vmem:[#allocation5 + $0x38] sm:$0xf]
          %v359 = vld [vmem:[#allocation5 + $0x3c] sm:$0xf]
          %v360 = vld [vmem:[%s2] sm:$0x1]
          %v362 = vlaneseq
          %v363 = vshrl.u32 %v362, 7
          %v364 = vsub.s32 0, %v363
          %v365 = vrot.slane %v360, %v364
          %v383 = vunpack.c.l.b16 %v344
          %v384 = vunpack.c.l.b16 %v345
          %v385 = vunpack.c.l.b16 %v346
          %v386 = vunpack.c.l.b16 %v347
          %v387 = vunpack.c.l.b16 %v348
          %v388 = vunpack.c.l.b16 %v349
          %v389 = vunpack.c.l.b16 %v350
          %v390 = vunpack.c.l.b16 %v351
          %v391 = vunpack.c.l.b16 %v352
          %v392 = vunpack.c.l.b16 %v353
          %v393 = vunpack.c.l.b16 %v354
          %v394 = vunpack.c.l.b16 %v355
          %v395 = vunpack.c.l.b16 %v356
          %v396 = vunpack.c.l.b16 %v357
          %v397 = vunpack.c.l.b16 %v358
          %v398 = vunpack.c.l.b16 %v359
          %v399 = vpack.c.b16 %v384, %v383
          %v400 = vpack.c.b16 %v386, %v385
          %v401 = vpack.c.b16 %v388, %v387
          %v402 = vpack.c.b16 %v390, %v389
          %v403 = vpack.c.b16 %v392, %v391
          %v404 = vpack.c.b16 %v394, %v393
          %v405 = vpack.c.b16 %v396, %v395
          %v406 = vpack.c.b16 %v398, %v397
          %415 = vmatprep.subr.bf16.mxu0 0
          %416 = vmatpush1.bf16.msra.mxu0 %v399
          %417 = vmatprep.subr.bf16.mxu0 0
          %418 = vmatpush1.bf16.msra.mxu0 %v400
          %419 = vmatprep.subr.bf16.mxu0 0
          %420 = vmatpush1.bf16.msra.mxu0 %v401
          %421 = vmatprep.subr.bf16.mxu0 0
          %422 = vmatpush1.bf16.msra.mxu0 %v402
          %423 = vmatprep.subr.bf16.mxu0 0
          %424 = vmatpush1.bf16.msra.mxu0 %v403
          %425 = vmatprep.subr.bf16.mxu0 0
          %426 = vmatpush1.bf16.msra.mxu0 %v404
          %427 = vmatprep.subr.bf16.mxu0 0
          %428 = vmatpush1.bf16.msra.mxu0 %v405
          %429 = vmatprep.subr.bf16.mxu0 0
          %430 = vmatpush1.bf16.msra.mxu0 %v406
          %431 = vmatprep.subr.bf16.mxu0 0
          %432 = vmatpush1.bf16.msra.mxu0 0
          %433 = vmatprep.subr.bf16.mxu0 0
          %434 = vmatpush1.bf16.msra.mxu0 0
          %435 = vmatprep.subr.bf16.mxu0 0
          %436 = vmatpush1.bf16.msra.mxu0 0
          %437 = vmatprep.subr.bf16.mxu0 0
          %438 = vmatpush1.bf16.msra.mxu0 0
          %439 = vmatprep.subr.bf16.mxu0 0
          %440 = vmatpush1.bf16.msra.mxu0 0
          %441 = vmatprep.subr.bf16.mxu0 0
          %442 = vmatpush1.bf16.msra.mxu0 0
          %443 = vmatprep.subr.bf16.mxu0 0
          %444 = vmatpush1.bf16.msra.mxu0 0
          %445 = vmatprep.subr.bf16.mxu0 0
          %446 = vmatpush1.bf16.msra.mxu0 0
          %447 = vmatprep.mubr.bf16.mxu0 0
          %448 = vmatmul.mubr.bf16.gmra.mrb[0].mxu0 %v343
          %v449 = vpop.f32.mrb[0].mxu0
          %v450 = vadd.f32 %v365, %v449
          %v451 = vpop.f32.mrb[0].mxu0
          %v452 = vpop.f32.mrb[0].mxu0
          %v453 = vpop.f32.mrb[0].mxu0
          %454 = vdwg.mxu0
          %s455 = smul.u32 %s28, 8
          %v456 = vpack.c.bf16 %v450, %v450
          %s457 = sshra.s32 %s455, 3
          %s458 = sand.u32 %s455, 7
          %s459 = smul.addr %s457, 4
          %s460 = scalar_lea.vmem [#allocation2], %s459
          %461 = vst [vmem:[%s460] sm:$0xf] %v456
          %v462 = vlaneseq
          %v463 = vand.u32 %v462, 127
          %v464 = vstv %s455
          %v465 = vadd.s32 %v463, %v464
          %vm466 = vcmp.lt.s32.totalorder %v465, 8
          %v467 = vsel %vm466, 1, 0
          %v468 = vcvt.s32.f32 %v467
          %vm469 = vcmask 64512
          %v471 = vsel %vm469, %v468, 0
          %473 = vmatprep.subr.mxu0 0.0
          %474 = vmatpush1.msra.mxu0 %v450
          %475 = vmatprep.subr.mxu0 0.0
          %476 = vmatpush1.msra.mxu0 0.0
          %477 = vmatprep.subr.mxu0 0.0
          %478 = vmatpush1.msra.mxu0 0.0
          %479 = vmatprep.subr.mxu0 0.0
          %480 = vmatpush1.msra.mxu0 0.0
          %481 = vmatprep.subr.mxu0 0.0
          %482 = vmatpush1.msra.mxu0 0.0
          %483 = vmatprep.subr.mxu0 0.0
          %484 = vmatpush1.msra.mxu0 0.0
          %485 = vmatprep.subr.mxu0 0.0
          %486 = vmatpush1.msra.mxu0 0.0
          %487 = vmatprep.subr.mxu0 0.0
          %488 = vmatpush1.msra.mxu0 0.0
          %489 = vmatprep.subr.mxu0 0.0
          %490 = vmatpush1.msra.mxu0 0.0
          %491 = vmatprep.subr.mxu0 0.0
          %492 = vmatpush1.msra.mxu0 0.0
          %493 = vmatprep.subr.mxu0 0.0
          %494 = vmatpush1.msra.mxu0 0.0
          %495 = vmatprep.subr.mxu0 0.0
          %496 = vmatpush1.msra.mxu0 0.0
          %497 = vmatprep.subr.mxu0 0.0
          %498 = vmatpush1.msra.mxu0 0.0
          %499 = vmatprep.subr.mxu0 0.0
          %500 = vmatpush1.msra.mxu0 0.0
          %501 = vmatprep.subr.mxu0 0.0
          %502 = vmatpush1.msra.mxu0 0.0
          %503 = vmatprep.subr.mxu0 0.0
          %504 = vmatpush1.msra.mxu0 0.0
          %505 = vmatprep.subr.mxu0 0.0
          %506 = vmatpush1.msra.mxu0 0.0
          %507 = vmatprep.subr.mxu0 0.0
          %508 = vmatpush1.msra.mxu0 0.0
          %509 = vmatprep.subr.mxu0 0.0
          %510 = vmatpush1.msra.mxu0 0.0
          %511 = vmatprep.subr.mxu0 0.0
          %512 = vmatpush1.msra.mxu0 0.0
          %513 = vmatprep.subr.mxu0 0.0
          %514 = vmatpush1.msra.mxu0 0.0
          %515 = vmatprep.subr.mxu0 0.0
          %516 = vmatpush1.msra.mxu0 0.0
          %517 = vmatprep.subr.mxu0 0.0
          %518 = vmatpush1.msra.mxu0 0.0
          %519 = vmatprep.subr.mxu0 0.0
          %520 = vmatpush1.msra.mxu0 0.0
          %521 = vmatprep.subr.mxu0 0.0
          %522 = vmatpush1.msra.mxu0 0.0
          %523 = vmatprep.subr.mxu0 0.0
          %524 = vmatpush1.msra.mxu0 0.0
          %525 = vmatprep.subr.mxu0 0.0
          %526 = vmatpush1.msra.mxu0 0.0
          %527 = vmatprep.subr.mxu0 0.0
          %528 = vmatpush1.msra.mxu0 0.0
          %529 = vmatprep.subr.mxu0 0.0
          %530 = vmatpush1.msra.mxu0 0.0
          %531 = vmatprep.subr.mxu0 0.0
          %532 = vmatpush1.msra.mxu0 0.0
          %533 = vmatprep.subr.mxu0 0.0
          %534 = vmatpush1.msra.mxu0 0.0
          %535 = vmatprep.subr.mxu0 0.0
          %536 = vmatpush1.msra.mxu0 0.0
          %537 = vmatprep.mubr.f32.mxu0 0.0
          %538 = vmatmul.mubr.f32.gmra.mrb[0].mxu0 %v471
          %v539 = vpop.f32.mrb[0].mxu0
          %v540 = vadd.f32 0.0, %v539
          %v541 = vpop.f32.mrb[0].mxu0
          %542 = vdwg.mxu0
          %v543 = vmul.f32 %v450, %v450
          %544 = vmatprep.subr.mxu0 0.0
          %545 = vmatpush1.msra.mxu0 %v543
          %546 = vmatprep.subr.mxu0 0.0
          %547 = vmatpush1.msra.mxu0 0.0
          %548 = vmatprep.subr.mxu0 0.0
          %549 = vmatpush1.msra.mxu0 0.0
          %550 = vmatprep.subr.mxu0 0.0
          %551 = vmatpush1.msra.mxu0 0.0
          %552 = vmatprep.subr.mxu0 0.0
          %553 = vmatpush1.msra.mxu0 0.0
          %554 = vmatprep.subr.mxu0 0.0
          %555 = vmatpush1.msra.mxu0 0.0
          %556 = vmatprep.subr.mxu0 0.0
          %557 = vmatpush1.msra.mxu0 0.0
          %558 = vmatprep.subr.mxu0 0.0
          %559 = vmatpush1.msra.mxu0 0.0
          %560 = vmatprep.subr.mxu0 0.0
          %561 = vmatpush1.msra.mxu0 0.0
          %562 = vmatprep.subr.mxu0 0.0
          %563 = vmatpush1.msra.mxu0 0.0
          %564 = vmatprep.subr.mxu0 0.0
          %565 = vmatpush1.msra.mxu0 0.0
          %566 = vmatprep.subr.mxu0 0.0
          %567 = vmatpush1.msra.mxu0 0.0
          %568 = vmatprep.subr.mxu0 0.0
          %569 = vmatpush1.msra.mxu0 0.0
          %570 = vmatprep.subr.mxu0 0.0
          %571 = vmatpush1.msra.mxu0 0.0
          %572 = vmatprep.subr.mxu0 0.0
          %573 = vmatpush1.msra.mxu0 0.0
          %574 = vmatprep.subr.mxu0 0.0
          %575 = vmatpush1.msra.mxu0 0.0
          %576 = vmatprep.subr.mxu0 0.0
          %577 = vmatpush1.msra.mxu0 0.0
          %578 = vmatprep.subr.mxu0 0.0
          %579 = vmatpush1.msra.mxu0 0.0
          %580 = vmatprep.subr.mxu0 0.0
          %581 = vmatpush1.msra.mxu0 0.0
          %582 = vmatprep.subr.mxu0 0.0
          %583 = vmatpush1.msra.mxu0 0.0
          %584 = vmatprep.subr.mxu0 0.0
          %585 = vmatpush1.msra.mxu0 0.0
          %586 = vmatprep.subr.mxu0 0.0
          %587 = vmatpush1.msra.mxu0 0.0
          %588 = vmatprep.subr.mxu0 0.0
          %589 = vmatpush1.msra.mxu0 0.0
          %590 = vmatprep.subr.mxu0 0.0
          %591 = vmatpush1.msra.mxu0 0.0
          %592 = vmatprep.subr.mxu0 0.0
          %593 = vmatpush1.msra.mxu0 0.0
          %594 = vmatprep.subr.mxu0 0.0
          %595 = vmatpush1.msra.mxu0 0.0
          %596 = vmatprep.subr.mxu0 0.0
          %597 = vmatpush1.msra.mxu0 0.0
          %598 = vmatprep.subr.mxu0 0.0
          %599 = vmatpush1.msra.mxu0 0.0
          %600 = vmatprep.subr.mxu0 0.0
          %601 = vmatpush1.msra.mxu0 0.0
          %602 = vmatprep.subr.mxu0 0.0
          %603 = vmatpush1.msra.mxu0 0.0
          %604 = vmatprep.subr.mxu0 0.0
          %605 = vmatpush1.msra.mxu0 0.0
          %606 = vmatprep.subr.mxu0 0.0
          %607 = vmatpush1.msra.mxu0 0.0
          %608 = vmatprep.mubr.f32.mxu0 0.0
          %609 = vmatmul.mubr.f32.gmra.mrb[0].mxu0 %v471
          %v610 = vpop.f32.mrb[0].mxu0
          %v611 = vadd.f32 0.0, %v610
          %v612 = vpop.f32.mrb[0].mxu0
          %613 = vdwg.mxu0
          %v614 = vld [vmem:[#allocation3] sm:$0x3]
          %v616 = vrot.slane %v611, 7
          %vm618 = vcmask 1040384
          %v619 = vsel %vm618, %v540, %v616
          %v620 = vadd.f32 %v614, %v619
          %621 = vst [vmem:[#allocation3] sm:$0x3] %v620
        $region60: #{jitted.1} parent=47 // pred_fallthru
          _
        %p622 = scmp.eq.s32.totalorder %s27, 1
        // Predicated region
        $region65: #{jitted.1} parent=47 // pred_check
          %p623 = pneg %p622
        $region66: #{jitted.1} parent=47 // pred_check_branch
          %625 = sbr.rel (%p623) target = $region68
        $region67: #{jitted.1} parent=47 // pred_region
          %p626 = scmp.eq.s32.totalorder %s28, 0
          // Predicated region
          $region69: #{jitted.1} parent=67 // pred_check
            %p627 = pneg %p626
          $region70: #{jitted.1} parent=67 // pred_check_branch
            %629 = sbr.rel (%p627) target = $region72
          $region71: #{jitted.1} parent=67 // pred_region
            %v630 = vld [vmem:[#allocation3] sm:$0x1]
            %v631 = vmul.f32 %v630, 0.125
            %v632 = vld [vmem:[#allocation3 + $0x1] sm:$0x1]
            %v633 = vmul.f32 %v632, 0.125
            %v634 = vmul.f32 %v631, %v631
            %v635 = vsub.f32 %v633, %v634
            %v636 = vmax.f32 %v635, 0.0
            %v637 = vadd.f32 %v636, 1e-05
            %v638 = vrsqrt.pop %v637
            %v639 = vld [vmem:[%s3] sm:$0x1]
            %v640 = vmul.f32 %v639, %v638
            %v641 = vld [vmem:[%s4] sm:$0x1]
            %v642 = vmul.f32 %v631, %v640
            %v643 = vsub.f32 %v641, %v642
            %v645 = vlaneseq
            %v646 = vshrl.u32 %v645, 7
            %v647 = vsub.s32 0, %v646
            %v648 = vrot.slane %v643, %v647
            %vm650 = vcmask 1040384
            %v651 = vsel %vm650, %v640, %v648
            %652 = vst [vmem:[#allocation4] sm:$0x3] %v651
          $region72: #{jitted.1} parent=67 // pred_fallthru
            _
          %s653 = smul.u32 %s28, 8
          %s654 = sshra.s32 %s653, 3
          %s655 = sand.u32 %s653, 7
          %s656 = smul.addr %s654, 4
          %s657 = scalar_lea.vmem [#allocation2], %s656
          %v658 = vld [vmem:[%s657] sm:$0xf]
          %v659 = vunpack.c.l.bf16 %v658
          %v660 = vld [vmem:[#allocation4] sm:$0x1]
          %v661 = vlaneseq
          %v662 = vshrl.u32 %v661, 7
          %v663 = vsub.s32 0, %v662
          %v664 = vrot.slane %v660, %v663
          %v665 = vmul.f32 %v659, %v664
          %v666 = vld [vmem:[#allocation4 + $0x1] sm:$0x1]
          %v667 = vlaneseq
          %v668 = vshrl.u32 %v667, 7
          %v669 = vsub.s32 0, %v668
          %v670 = vrot.slane %v666, %v669
          %v671 = vadd.f32 %v665, %v670
          %v672 = vpack.c.bf16 %v671, %v671
          %v673 = vld [vmem:[#allocation8] sm:$0xf]
          %v674 = vld [vmem:[#allocation8 + $0x4] sm:$0xf]
          %v675 = vld [vmem:[#allocation8 + $0x8] sm:$0xf]
          %v676 = vld [vmem:[#allocation8 + $0xc] sm:$0xf]
          %v677 = vld [vmem:[#allocation8 + $0x10] sm:$0xf]
          %v678 = vld [vmem:[#allocation8 + $0x14] sm:$0xf]
          %v679 = vld [vmem:[#allocation8 + $0x18] sm:$0xf]
          %v680 = vld [vmem:[#allocation8 + $0x1c] sm:$0xf]
          %v681 = vld [vmem:[#allocation8 + $0x20] sm:$0xf]
          %v682 = vld [vmem:[#allocation8 + $0x24] sm:$0xf]
          %v683 = vld [vmem:[#allocation8 + $0x28] sm:$0xf]
          %v684 = vld [vmem:[#allocation8 + $0x2c] sm:$0xf]
          %v685 = vld [vmem:[#allocation8 + $0x30] sm:$0xf]
          %v686 = vld [vmem:[#allocation8 + $0x34] sm:$0xf]
          %v687 = vld [vmem:[#allocation8 + $0x38] sm:$0xf]
          %v688 = vld [vmem:[#allocation8 + $0x3c] sm:$0xf]
          %v689 = vld [vmem:[%s6] sm:$0x1]
          %v691 = vlaneseq
          %v692 = vshrl.u32 %v691, 7
          %v693 = vsub.s32 0, %v692
          %v694 = vrot.slane %v689, %v693
          %v712 = vunpack.c.l.b16 %v673
          %v713 = vunpack.c.l.b16 %v674
          %v714 = vunpack.c.l.b16 %v675
          %v715 = vunpack.c.l.b16 %v676
          %v716 = vunpack.c.l.b16 %v677
          %v717 = vunpack.c.l.b16 %v678
          %v718 = vunpack.c.l.b16 %v679
          %v719 = vunpack.c.l.b16 %v680
          %v720 = vunpack.c.l.b16 %v681
          %v721 = vunpack.c.l.b16 %v682
          %v722 = vunpack.c.l.b16 %v683
          %v723 = vunpack.c.l.b16 %v684
          %v724 = vunpack.c.l.b16 %v685
          %v725 = vunpack.c.l.b16 %v686
          %v726 = vunpack.c.l.b16 %v687
          %v727 = vunpack.c.l.b16 %v688
          %v728 = vpack.c.b16 %v713, %v712
          %v729 = vpack.c.b16 %v715, %v714
          %v730 = vpack.c.b16 %v717, %v716
          %v731 = vpack.c.b16 %v719, %v718
          %v732 = vpack.c.b16 %v721, %v720
          %v733 = vpack.c.b16 %v723, %v722
          %v734 = vpack.c.b16 %v725, %v724
          %v735 = vpack.c.b16 %v727, %v726
          %744 = vmatprep.subr.bf16.mxu0 0
          %745 = vmatpush1.bf16.msra.mxu0 %v728
          %746 = vmatprep.subr.bf16.mxu0 0
          %747 = vmatpush1.bf16.msra.mxu0 %v729
          %748 = vmatprep.subr.bf16.mxu0 0
          %749 = vmatpush1.bf16.msra.mxu0 %v730
          %750 = vmatprep.subr.bf16.mxu0 0
          %751 = vmatpush1.bf16.msra.mxu0 %v731
          %752 = vmatprep.subr.bf16.mxu0 0
          %753 = vmatpush1.bf16.msra.mxu0 %v732
          %754 = vmatprep.subr.bf16.mxu0 0
          %755 = vmatpush1.bf16.msra.mxu0 %v733
          %756 = vmatprep.subr.bf16.mxu0 0
          %757 = vmatpush1.bf16.msra.mxu0 %v734
          %758 = vmatprep.subr.bf16.mxu0 0
          %759 = vmatpush1.bf16.msra.mxu0 %v735
          %760 = vmatprep.subr.bf16.mxu0 0
          %761 = vmatpush1.bf16.msra.mxu0 0
          %762 = vmatprep.subr.bf16.mxu0 0
          %763 = vmatpush1.bf16.msra.mxu0 0
          %764 = vmatprep.subr.bf16.mxu0 0
          %765 = vmatpush1.bf16.msra.mxu0 0
          %766 = vmatprep.subr.bf16.mxu0 0
          %767 = vmatpush1.bf16.msra.mxu0 0
          %768 = vmatprep.subr.bf16.mxu0 0
          %769 = vmatpush1.bf16.msra.mxu0 0
          %770 = vmatprep.subr.bf16.mxu0 0
          %771 = vmatpush1.bf16.msra.mxu0 0
          %772 = vmatprep.subr.bf16.mxu0 0
          %773 = vmatpush1.bf16.msra.mxu0 0
          %774 = vmatprep.subr.bf16.mxu0 0
          %775 = vmatpush1.bf16.msra.mxu0 0
          %776 = vmatprep.mubr.bf16.mxu0 0
          %777 = vmatmul.mubr.bf16.gmra.mrb[0].mxu0 %v672
          %v778 = vpop.f32.mrb[0].mxu0
          %v779 = vadd.f32 %v694, %v778
          %v780 = vpop.f32.mrb[0].mxu0
          %v781 = vpop.f32.mrb[0].mxu0
          %v782 = vpop.f32.mrb[0].mxu0
          %783 = vdwg.mxu0
          %784 = vst [vmem:[%s323] sm:$0xff] %v779
        $region68: #{jitted.1} parent=47 // pred_fallthru
          _
        %s785 = sand.u32 %s201, 1
        %s786 = scalar_lea.sflag [#allocation7], %s785
        %s787 = sand.u32 %s201, 1
        %s788 = smul.addr %s787, 8
        %s789 = scalar_lea.vmem [#allocation10], %s788
        // Predicated region
        $region73: #{jitted.1} parent=47 // pred_check
          %p790 = pneg %p211
        $region74: #{jitted.1} parent=47 // pred_check_branch
          %792 = sbr.rel (%p790) target = $region76
        $region75: #{jitted.1} parent=47 // pred_region
          %s793 = smul.u32 %s27, %s28
          %s795 = ssub.s32 128, 128
          %796 = vsyncadd %s786, %s795
          %s797 = smul.addr %s793, 128
          %s798 = scalar_lea.hbm %s7, %s797
          %s800 = sshll.u32 %s789, 4
          %s801 = int_to_ptr.vmem [resolvable:$true] %s800
          %803 = dma.vmem_to_hbm [thread:$0]  %s801, 128, %s798, %s786
        $region76: #{jitted.1} parent=47 // pred_fallthru
          _
      $region48: #{jitted.1} parent=5 // pred_fallthru
        _
      %p804 = scmp.le.s32.totalorder 2, %s18
      // Predicated region
      $region77: #{jitted.1} parent=5 // pred_check
        %p805 = pneg %p804
      $region78: #{jitted.1} parent=5 // pred_check_branch
        %807 = sbr.rel (%p805) target = $region80
      $region79: #{jitted.1} parent=5 // pred_region
        %s808 = ssub.s32 %s18, 2
        // Predicated region
        $region81: #{jitted.1} parent=79 // pred_check
          %p809 = pneg %p217
        $region82: #{jitted.1} parent=79 // pred_check_branch
          %811 = sbr.rel (%p809) target = $region84
        $region83: #{jitted.1} parent=79 // pred_region
          %s812 = sand.u32 %s202, 1
          %s813 = scalar_lea.sflag [#allocation7], %s812
          %s814 = sand.u32 %s202, 1
          %s815 = smul.addr %s814, 8
          %s816 = scalar_lea.vmem [#allocation10], %s815
          %817 = dma.done %s813, 128
        $region84: #{jitted.1} parent=79 // pred_fallthru
          _
      $region80: #{jitted.1} parent=5 // pred_fallthru
        _
    $region6: #{jitted.1} parent=1 // loop_footer
      %s22 = sadd.s32 1, %s18
    $region7: #{jitted.1} parent=1 // loop_footer_branch
      %17 = sbr.rel target = $region3
    $region8: #{jitted.1} parent=1 // loop_exit
      _
    %818 = vsyncpa [#allocation6], 1
    %s819 = scalar_lea.sflag [#allocation6], 1
    %820 = vsyncpa %s819, 1
    %821 = vsyncpa [#allocation9], 1
    %822 = vsyncpa [#allocation7], 1
    %s823 = scalar_lea.sflag [#allocation7], 1
    %824 = vsyncpa %s823, 1

</llo_original>
